<compile_context>
chip_gen: v7x
topology: tpu7x:2x2x1
jax: 0.10.0
libtpu: 0.0.40
codegen_flags: <defaults>
</compile_context>

<pallas_src>
import functools
import math

import jax
import jax.numpy as jnp
from jax.experimental import pallas as pl
from jax.experimental.pallas import tpu as pltpu


def _round_up(x, m):
    return ((x + m - 1) // m) * m


# ----------------------------------------------------------------------------
# Pallas kernel: one FAM_RelGraphConv layer (+ fused tanh)
# ----------------------------------------------------------------------------
def _rel_gcn_layer_kernel(w_first, a_ref, feat_src_ref, feat_dst_ref, w_ref,
                          loop_w_ref, bias_ref, deg_ref, o_ref):
    """grid = (dst_tiles, R); r = program_id(1) is the relation reduction axis."""
    r = pl.program_id(1)

    @pl.when(r == 0)
    def _init():
        # self-loop term + attention-weighted bias term; o_ref is the f32 accumulator
        # (output block index is constant across r, so the tile stays resident).
        o_ref[...] = (
            jnp.dot(feat_dst_ref[...], loop_w_ref[...],
                    preferred_element_type=jnp.float32)
            + deg_ref[...] * bias_ref[...]
        )

    compute_dtype = feat_src_ref.dtype
    if w_first:
        # A_r @ (feat @ W_r): fewer FLOPs when dout < din (e.g. layer 2).
        hw = jnp.dot(feat_src_ref[...], w_ref[...],
                     preferred_element_type=jnp.float32)
        o_ref[...] += jnp.dot(a_ref[...], hw.astype(compute_dtype),
                              preferred_element_type=jnp.float32)
    else:
        # (A_r @ feat) @ W_r: fewer FLOPs when din <= dout (e.g. layer 1).
        agg = jnp.dot(a_ref[...], feat_src_ref[...],
                      preferred_element_type=jnp.float32)
        o_ref[...] += jnp.dot(agg.astype(compute_dtype), w_ref[...],
                              preferred_element_type=jnp.float32)

    @pl.when(r == pl.num_programs(1) - 1)
    def _finalize():
        o_ref[...] = jnp.tanh(o_ref[...])


def rel_gcn_layer(A, deg, feat, W, bias, loop_w, *,
                  compute_dtype=jnp.float32, tile_n=None):
    """One FAM_RelGraphConv layer followed by tanh, as a single pallas_call."""
    R, N, _ = A.shape
    din, dout = loop_w.shape

    if R == 0:  # degenerate graph: no relations -> only self-loop + bias term
        return jnp.tanh(feat @ loop_w + deg * bias.reshape(1, dout))

    # ---- pad to TPU-friendly shapes (lane dims -> 128, dst tiles -> multiple of 8) ----
    din_p = _round_up(din, 128)
    dout_p = _round_up(dout, 128)
    if tile_n is None:
        # v7x (64 MiB VMEM): keep tiles ~512; v6e (128 MiB) could afford 1024.
        tile_n = min(512, _round_up(N, 8))
    n_p = _round_up(N, tile_n)

    cdt = compute_dtype
    A_p = jnp.zeros((R, n_p, n_p), cdt).at[:, :N, :N].set(A.astype(cdt))
    feat_p = jnp.zeros((n_p, din_p), cdt).at[:N, :din].set(feat.astype(cdt))
    W_p = jnp.zeros((R, din_p, dout_p), cdt).at[:, :din, :dout].set(W.astype(cdt))
    lw_p = jnp.zeros((din_p, dout_p), cdt).at[:din, :dout].set(loop_w.astype(cdt))
    bias_p = jnp.zeros((1, dout_p), jnp.float32).at[0, :dout].set(bias.astype(jnp.float32))
    deg_p = jnp.zeros((n_p, 1), jnp.float32).at[:N, :].set(deg.astype(jnp.float32))

    n_tiles = n_p // tile_n
    # NOTE: with many dst tiles the w_first form recomputes feat@W_r per tile; fine here.
    w_first = dout < din

    # VMEM budget: every block is double-buffered by the pipeline; cap v7x-safe.
    isz = jnp.dtype(cdt).itemsize
    block_bytes = (tile_n * n_p * isz            # A_r tile
                   + n_p * din_p * isz           # full feat (src side)
                   + tile_n * din_p * isz        # feat dst tile (self loop)
                   + 2 * din_p * dout_p * isz    # W_r + loop_weight
                   + dout_p * 4 + tile_n * 4     # bias + deg
                   + tile_n * dout_p * 4)        # output tile (f32 accumulator)
    vmem_limit = int(min(max(2 * block_bytes + (4 << 20), 16 << 20), 48 << 20))

    out_p = pl.pallas_call(
        functools.partial(_rel_gcn_layer_kernel, w_first),
        out_shape=jax.ShapeDtypeStruct((n_p, dout_p), jnp.float32),
        grid_spec=pltpu.PrefetchScalarGridSpec(
            num_scalar_prefetch=0,
            grid=(n_tiles, R),                                               # reduction last
            in_specs=[
                pl.BlockSpec((None, tile_n, n_p), lambda i, r: (r, i, 0)),    # A_r dst-tile
                pl.BlockSpec((n_p, din_p), lambda i, r: (0, 0)),              # feat (all src)
                pl.BlockSpec((tile_n, din_p), lambda i, r: (i, 0)),           # feat (dst tile)
                pl.BlockSpec((None, din_p, dout_p), lambda i, r: (r, 0, 0)),  # W_r
                pl.BlockSpec((din_p, dout_p), lambda i, r: (0, 0)),           # loop_weight
                pl.BlockSpec((1, dout_p), lambda i, r: (0, 0)),               # bias
                pl.BlockSpec((tile_n, 1), lambda i, r: (i, 0)),               # deg (dst tile)
            ],
            out_specs=pl.BlockSpec((tile_n, dout_p), lambda i, r: (i, 0)),
        ),
        compiler_params=pltpu.CompilerParams(
            dimension_semantics=("parallel", "arbitrary"),
            vmem_limit_bytes=vmem_limit),
    )(A_p, feat_p, feat_p, W_p, lw_p, bias_p, deg_p)

    return out_p[:N, :dout]


# ----------------------------------------------------------------------------
# Glue: graph -> dense per-relation adjacency, parameter init, full forward
# ----------------------------------------------------------------------------
def build_dense_graph(src, dst, etype, att, num_nodes, num_rels):
    oh_r = jax.nn.one_hot(etype, num_rels, dtype=jnp.float32)       # [E, R]
    oh_dst = jax.nn.one_hot(dst, num_nodes, dtype=jnp.float32)      # [E, N]
    oh_src = jax.nn.one_hot(src, num_nodes, dtype=jnp.float32)      # [E, N]
    A = jnp.einsum('er,ev,eu,e->rvu', oh_r, oh_dst, oh_src, att)    # [R, N, N]
    deg = (oh_dst * att[:, None]).sum(axis=0)[:, None]              # [N, 1]
    return A, deg


def xavier_uniform(key, shape, gain):
    # mirrors torch.nn.init.xavier_uniform_ fan computation
    receptive = int(math.prod(shape[2:])) if len(shape) > 2 else 1
    fan_in = shape[1] * receptive
    fan_out = shape[0] * receptive
    bound = gain * math.sqrt(6.0 / (fan_in + fan_out))
    return jax.random.uniform(key, shape, jnp.float32, -bound, bound)


def init_params(key, input_dim, h_dim, out_dim, num_rels):
    gain = math.sqrt(2.0)  # calculate_gain('relu')
    k1, k2, k3, k4 = jax.random.split(key, 4)
    return {
        "W1": xavier_uniform(k1, (num_rels, input_dim, h_dim), gain),
        "b1": jnp.zeros((h_dim,), jnp.float32),
        "lw1": xavier_uniform(k2, (input_dim, h_dim), gain),
        "W2": xavier_uniform(k3, (num_rels, h_dim, out_dim), gain),
        "b2": jnp.zeros((out_dim,), jnp.float32),
        "lw2": xavier_uniform(k4, (h_dim, out_dim), gain),
    }


def fam_rel_gcn_forward(params, feat, src, dst, etype, attention,
                        num_nodes, num_rels, *, compute_dtype=jnp.float32):
    A, deg = build_dense_graph(src, dst, etype, attention, num_nodes, num_rels)
    x = rel_gcn_layer(A, deg, feat, params["W1"], params["b1"], params["lw1"],
                      compute_dtype=compute_dtype)
    x = rel_gcn_layer(A, deg, x, params["W2"], params["b2"], params["lw2"],
                      compute_dtype=compute_dtype)
    return x


# Pure-JAX edge-wise reference (mirrors the DGL message/sum semantics).
def _ref_layer(feat, src, dst, etype, att, W, b, lw, num_nodes):
    msgs = (jnp.einsum('ei,eio->eo', feat[src], W[etype]) + b) * att[:, None]
    h = jnp.zeros((num_nodes, W.shape[2]), jnp.float32).at[dst].add(msgs)
    return jnp.tanh(h + feat @ lw)


def _ref_forward(params, feat, src, dst, etype, att, num_nodes):
    x = _ref_layer(feat, src, dst, etype, att,
                   params["W1"], params["b1"], params["lw1"], num_nodes)
    x = _ref_layer(x, src, dst, etype, att,
                   params["W2"], params["b2"], params["lw2"], num_nodes)
    return x


if __name__ == "__main__":
    key = jax.random.PRNGKey(0)
    k_param, k_feat, k_src, k_dst, k_et, k_att = jax.random.split(key, 6)

    N, E = 8, 20
    input_dim, h_dim, out_dim, num_rels = 8, 16, 8, 3

    params = init_params(k_param, input_dim, h_dim, out_dim, num_rels)

    feat = jax.random.normal(k_feat, (N, input_dim), jnp.float32)
    src = jax.random.randint(k_src, (E,), 0, N, jnp.int32)
    dst = jax.random.randint(k_dst, (E,), 0, N, jnp.int32)
    etype = jax.random.randint(k_et, (E,), 0, num_rels, jnp.int32)
    # TODO(synk): TSFuzzyLayer (attention producer) is undefined in the reference;
    # use a deterministic placeholder attention in (0, 1).
    attention = jax.random.uniform(k_att, (E,), jnp.float32, 0.1, 1.0)

    ref = _ref_forward(params, feat, src, dst, etype, attention, N)

    # f32 path: tight correctness check against the edge-wise reference.
    out = fam_rel_gcn_forward(params, feat, src, dst, etype, attention, N, num_rels,
                              compute_dtype=jnp.float32)
    out = jax.block_until_ready(out)
    assert out.shape == (N, out_dim)
    assert bool(jnp.allclose(out, ref, atol=1e-4, rtol=1e-4)), \
        float(jnp.max(jnp.abs(out - ref)))

    # bf16 compute path (production setting: halves A-stream HBM bytes, bf16 MXU);
    # compared against the f32 reference with a correspondingly looser tolerance.
    out_bf16 = fam_rel_gcn_forward(params, feat, src, dst, etype, attention, N, num_rels,
                                   compute_dtype=jnp.bfloat16)
    out_bf16 = jax.block_until_ready(out_bf16)
    assert out_bf16.shape == (N, out_dim)
    assert bool(jnp.allclose(out_bf16, ref, atol=1e-1, rtol=1e-1)), \
        float(jnp.max(jnp.abs(out_bf16 - ref)))

    print("KERNEL_OK")
</pallas_src>

<mosaic_0001>
module attributes {stable_mosaic.version = 11 : i64} {
  func.func @_rel_gcn_layer_kernel(%arg0: i32, %arg1: i32, %arg2: memref<1x8x8xf32, #tpu.memory_space<vmem>>, %arg3: memref<8x128xf32, #tpu.memory_space<vmem>>, %arg4: memref<8x128xf32, #tpu.memory_space<vmem>>, %arg5: memref<1x128x128xf32, #tpu.memory_space<vmem>>, %arg6: memref<128x128xf32, #tpu.memory_space<vmem>>, %arg7: memref<1x128xf32, #tpu.memory_space<vmem>>, %arg8: memref<8x1xf32, #tpu.memory_space<vmem>>, %arg9: memref<8x128xf32, #tpu.memory_space<vmem>>) attributes {dimension_semantics = [#tpu.dimension_semantics<parallel>, #tpu.dimension_semantics<arbitrary>], iteration_bounds = array<i64: 1, 3>, scalar_prefetch = 0 : i64, scratch_operands = 0 : i64, tpu.core_type = #tpu.core_type<tc>, window_params = [{transform_indices = @transform_0, window_bounds = array<i64: 1, 8, 8>}, {pipeline_mode = #tpu.pipeline_mode<synchronous>, transform_indices = @transform_1, window_bounds = array<i64: 8, 128>}, {transform_indices = @transform_2, window_bounds = array<i64: 8, 128>}, {transform_indices = @transform_3, window_bounds = array<i64: 1, 128, 128>}, {pipeline_mode = #tpu.pipeline_mode<synchronous>, transform_indices = @transform_4, window_bounds = array<i64: 128, 128>}, {pipeline_mode = #tpu.pipeline_mode<synchronous>, transform_indices = @transform_5, window_bounds = array<i64: 1, 128>}, {transform_indices = @transform_6, window_bounds = array<i64: 8, 1>}, {transform_indices = @transform_7, window_bounds = array<i64: 8, 128>}]} {
    %c0_i32 = arith.constant 0 : i32
    %0 = arith.cmpi eq, %arg1, %c0_i32 : i32
    %1 = arith.extui %0 : i1 to i32
    %c0_i32_0 = arith.constant 0 : i32
    %2 = arith.cmpi ne, %1, %c0_i32_0 : i32
    scf.if %2 {
      %c0_14 = arith.constant 0 : index
      %c0_15 = arith.constant 0 : index
      %16 = vector.load %arg4[%c0_14, %c0_15] : memref<8x128xf32, #tpu.memory_space<vmem>>, vector<8x128xf32>
      %c0_16 = arith.constant 0 : index
      %c0_17 = arith.constant 0 : index
      %17 = vector.load %arg6[%c0_16, %c0_17] : memref<128x128xf32, #tpu.memory_space<vmem>>, vector<128x128xf32>
      %cst_18 = arith.constant dense<0.000000e+00> : vector<8x128xf32>
      %18 = tpu.matmul %16, %17, %cst_18 {dimension_numbers = #tpu.dot_dimension_numbers<[1], [0], [0], [1], [0, 0, 1, 1], [], []>} : vector<8x128xf32>, vector<128x128xf32>, vector<8x128xf32> -> vector<8x128xf32>
      %c0_19 = arith.constant 0 : index
      %c0_20 = arith.constant 0 : index
      %19 = vector.load %arg8[%c0_19, %c0_20] : memref<8x1xf32, #tpu.memory_space<vmem>>, vector<8x1xf32>
      %c0_21 = arith.constant 0 : index
      %c0_22 = arith.constant 0 : index
      %20 = vector.load %arg7[%c0_21, %c0_22] : memref<1x128xf32, #tpu.memory_space<vmem>>, vector<1x128xf32>
      %21 = vector.broadcast %19 : vector<8x1xf32> to vector<8x128xf32>
      %22 = vector.broadcast %20 : vector<1x128xf32> to vector<8x128xf32>
      %23 = arith.mulf %21, %22 : vector<8x128xf32>
      %24 = arith.addf %18, %23 : vector<8x128xf32>
      %c0_23 = arith.constant 0 : index
      %c0_24 = arith.constant 0 : index
      %25 = vector.load %arg9[%c0_23, %c0_24] : memref<8x128xf32, #tpu.memory_space<vmem>>, vector<8x128xf32>
      tpu.vector_store %arg9[%c0_23, %c0_24], %24 {strides = array<i32>} : memref<8x128xf32, #tpu.memory_space<vmem>>, vector<8x128xf32>,
    } else {
    }
    %c0 = arith.constant 0 : index
    %c0_1 = arith.constant 0 : index
    %c0_2 = arith.constant 0 : index
    %3 = vector.load %arg2[%c0, %c0_1, %c0_2] : memref<1x8x8xf32, #tpu.memory_space<vmem>>, vector<1x8x8xf32>
    %4 = vector.shape_cast %3 : vector<1x8x8xf32> to vector<8x8xf32>
    %c0_3 = arith.constant 0 : index
    %c0_4 = arith.constant 0 : index
    %5 = vector.load %arg3[%c0_3, %c0_4] : memref<8x128xf32, #tpu.memory_space<vmem>>, vector<8x128xf32>
    %cst = arith.constant dense<0.000000e+00> : vector<8x128xf32>
    %6 = tpu.matmul %4, %5, %cst {dimension_numbers = #tpu.dot_dimension_numbers<[1], [0], [0], [1], [0, 0, 1, 1], [], []>} : vector<8x8xf32>, vector<8x128xf32>, vector<8x128xf32> -> vector<8x128xf32>
    %c0_5 = arith.constant 0 : index
    %c0_6 = arith.constant 0 : index
    %7 = vector.load %arg9[%c0_5, %c0_6] : memref<8x128xf32, #tpu.memory_space<vmem>>, vector<8x128xf32>
    %c0_7 = arith.constant 0 : index
    %c0_8 = arith.constant 0 : index
    %c0_9 = arith.constant 0 : index
    %8 = vector.load %arg5[%c0_7, %c0_8, %c0_9] : memref<1x128x128xf32, #tpu.memory_space<vmem>>, vector<1x128x128xf32>
    %9 = vector.shape_cast %8 : vector<1x128x128xf32> to vector<128x128xf32>
    %cst_10 = arith.constant dense<0.000000e+00> : vector<8x128xf32>
    %10 = tpu.matmul %6, %9, %cst_10 {dimension_numbers = #tpu.dot_dimension_numbers<[1], [0], [0], [1], [0, 0, 1, 1], [], []>} : vector<8x128xf32>, vector<128x128xf32>, vector<8x128xf32> -> vector<8x128xf32>
    %11 = arith.addf %7, %10 : vector<8x128xf32>
    %c0_11 = arith.constant 0 : index
    %c0_12 = arith.constant 0 : index
    %12 = vector.load %arg9[%c0_11, %c0_12] : memref<8x128xf32, #tpu.memory_space<vmem>>, vector<8x128xf32>
    tpu.vector_store %arg9[%c0_11, %c0_12], %11 {strides = array<i32>} : memref<8x128xf32, #tpu.memory_space<vmem>>, vector<8x128xf32>,
    %c2_i32 = arith.constant 2 : i32
    %13 = arith.cmpi eq, %arg1, %c2_i32 : i32
    %14 = arith.extui %13 : i1 to i32
    %c0_i32_13 = arith.constant 0 : i32
    %15 = arith.cmpi ne, %14, %c0_i32_13 : i32
    scf.if %15 {
      %c0_14 = arith.constant 0 : index
      %c0_15 = arith.constant 0 : index
      %16 = vector.load %arg9[%c0_14, %c0_15] : memref<8x128xf32, #tpu.memory_space<vmem>>, vector<8x128xf32>
      %17 = math.tanh %16 : vector<8x128xf32>
      %c0_16 = arith.constant 0 : index
      %c0_17 = arith.constant 0 : index
      %18 = vector.load %arg9[%c0_16, %c0_17] : memref<8x128xf32, #tpu.memory_space<vmem>>, vector<8x128xf32>
      tpu.vector_store %arg9[%c0_16, %c0_17], %17 {strides = array<i32>} : memref<8x128xf32, #tpu.memory_space<vmem>>, vector<8x128xf32>,
    } else {
    }
    return
  }
  func.func @transform_0(%arg0: i32, %arg1: i32) -> (i32, i32, i32) {
    %c0_i32 = arith.constant 0 : i32
    %c0_i32_0 = arith.constant 0 : i32
    return %arg1, %arg0, %c0_i32 : i32, i32, i32
  }
  func.func @transform_1(%arg0: i32, %arg1: i32) -> (i32, i32) {
    %c0_i32 = arith.constant 0 : i32
    %c0_i32_0 = arith.constant 0 : i32
    %c0_i32_1 = arith.constant 0 : i32
    return %c0_i32, %c0_i32_0 : i32, i32
  }
  func.func @transform_2(%arg0: i32, %arg1: i32) -> (i32, i32) {
    %c0_i32 = arith.constant 0 : i32
    %c0_i32_0 = arith.constant 0 : i32
    return %arg0, %c0_i32 : i32, i32
  }
  func.func @transform_3(%arg0: i32, %arg1: i32) -> (i32, i32, i32) {
    %c0_i32 = arith.constant 0 : i32
    %c0_i32_0 = arith.constant 0 : i32
    %c0_i32_1 = arith.constant 0 : i32
    return %arg1, %c0_i32, %c0_i32_0 : i32, i32, i32
  }
  func.func @transform_4(%arg0: i32, %arg1: i32) -> (i32, i32) {
    %c0_i32 = arith.constant 0 : i32
    %c0_i32_0 = arith.constant 0 : i32
    %c0_i32_1 = arith.constant 0 : i32
    return %c0_i32, %c0_i32_0 : i32, i32
  }
  func.func @transform_5(%arg0: i32, %arg1: i32) -> (i32, i32) {
    %c0_i32 = arith.constant 0 : i32
    %c0_i32_0 = arith.constant 0 : i32
    %c0_i32_1 = arith.constant 0 : i32
    return %c0_i32, %c0_i32_0 : i32, i32
  }
  func.func @transform_6(%arg0: i32, %arg1: i32) -> (i32, i32) {
    %c0_i32 = arith.constant 0 : i32
    %c0_i32_0 = arith.constant 0 : i32
    return %arg0, %c0_i32 : i32, i32
  }
  func.func @transform_7(%arg0: i32, %arg1: i32) -> (i32, i32) {
    %c0_i32 = arith.constant 0 : i32
    %c0_i32_0 = arith.constant 0 : i32
    return %arg0, %c0_i32 : i32, i32
  }
}

</mosaic_0001>

<llo_original>
// kernel: tpu_custom_call.1
$region0: #{tpu_custom_call.1}
  #allocation0 [shape = 'u32[]', space=smem, size = 0x4, offset = 0x4, fixed_abs, tag = 'smem constant byte address 0x4 - core index']
  #allocation1 [shape = 'u32[144,128]{1,0:T(1,128)}', space=vmem, size = 0x12000, scoped, tag = 'internal scratch']
  %s0 = inlined_call_operand.hbm [shape: f32[3,8,8], index: 0, kind: input, shape index: {}]
  %s1 = inlined_call_operand.vmem [shape: f32[8,128], index: 1, kind: input, shape index: {}]
  %s2 = inlined_call_operand.vmem [shape: f32[8,128], index: 2, kind: input, shape index: {}]
  %s3 = inlined_call_operand.hbm [shape: f32[3,128,128], index: 3, kind: input, shape index: {}]
  %s4 = inlined_call_operand.hbm [shape: f32[128,128], index: 4, kind: input, shape index: {}]
  %s5 = inlined_call_operand.vmem [shape: f32[1,128], index: 5, kind: input, shape index: {}]
  %s6 = inlined_call_operand.vmem [shape: f32[8,1], index: 6, kind: input, shape index: {}]
  %s7 = inlined_call_operand.hbm [shape: f32[8,128], index: 7, kind: output, shape index: {}]
  %s8 = sld [smem:[#allocation0]]
  $region81: #{tpu_custom_call.1} parent=0
    _
  %s10 = ssub.s32 1, %s8
  %s11 = scalar_select 0, %s10, %s8
  $region1: #{tpu_custom_call.1} parent=0
    #allocation2 [shape = 'u8[8192]{0}', space=vmem, size = 0x2000, scoped, tag = 'input window, operand 0']
    #allocation3 [shape = 's32[2]{0}', space=sflag, size = 0x8, scoped, tag = 'scoped memory for tpu_custom_call.1']
    #allocation4 [shape = 's32[2]{0}', space=sflag, size = 0x8, scoped, tag = 'scoped memory for tpu_custom_call.1']
    #allocation5 [shape = 'u8[131072]{0}', space=vmem, size = 0x20000, scoped, tag = 'input window, operand 3']
    #allocation6 [shape = 's32[2]{0}', space=sflag, size = 0x8, scoped, tag = 'scoped memory for tpu_custom_call.1']
    #allocation7 [shape = 'u8[65536]{0}', space=vmem, size = 0x10000, scoped, tag = 'input window, operand 4, single buffered']
    #allocation8 [shape = 'u8[4096]{0}', space=vmem, size = 0x1000, scoped, tag = 'output window, operand 0, single buffered']
    %12 = vsyncpa [#allocation3], 0
    %s13 = scalar_lea.sflag [#allocation3], 1
    %14 = vsyncpa %s13, 0
    %15 = vsyncpa [#allocation6], 0
    %s16 = scalar_lea.sflag [#allocation6], 1
    %17 = vsyncpa %s16, 0
    %18 = vsyncpa [#allocation4], 0
    loop: start=0, step=1, limit=5
    $region2: #{tpu_custom_call.1} parent=1 // loop_pre_header
      _
    $region3: #{tpu_custom_call.1} parent=1 // loop_header
      %s20 = sphi 0, %s24
      %p21 = scmp.ge.s32.totalorder %s20, 5
      %s27 = sphi 0, %s39
      %s28 = sphi 0, %s35
      %s29 = sphi 0, %s27
      %s30 = sphi 0, %s28
      %s31 = sphi 0, %s29
      %s32 = sphi 0, %s30
      %s44 = sphi 0, %s46
      %s47 = sphi 0, %s44
      %s48 = sphi 0, %s47
      %s64 = sphi 0, %s48
      %s68 = sphi 0, %s68
      %s70 = sphi 0, %s68
      %s71 = sphi 0, %s70
      %s85 = sphi 0, %s71
      %s91 = sphi 0, %s93
      %s94 = sphi 0, %s91
      %s95 = sphi 0, %s94
      %s111 = sphi 0, %s95
      %s117 = sphi 0, %s119
      %s120 = sphi 0, %s117
      %s121 = sphi 0, %s120
      %s137 = sphi 0, %s121
      %s141 = sphi 0, %s141
      %s143 = sphi 0, %s141
      %s144 = sphi 0, %s143
      %s158 = sphi 0, %s144
      %s162 = sphi 0, %s162
      %s164 = sphi 0, %s162
      %s165 = sphi 0, %s164
      %s179 = sphi 0, %s165
      %s185 = sphi 0, %s187
      %s188 = sphi 0, %s185
      %s189 = sphi 0, %s188
      %s205 = sphi 0, %s189
      %s211 = sphi 0, %s213
      %s214 = sphi 0, %s211
      %s215 = sphi 0, %s214
      %s231 = sphi 0, %s215
    $region4: #{tpu_custom_call.1} parent=1 // loop_header_branch
      %23 = sbr.rel (%p21) target = $region8
    $region5: #{tpu_custom_call.1} parent=1 // loop_body
      %s25 = ssub.s32 %s20, 1
      %s26 = ssub.s32 %s20, 2
      %s33 = sadd.s32 1, %s28
      %p34 = scmp.ge.s32.totalorder %s33, 3
      %s35 = scalar_select %p34, 0, %s33
      %s36 = sadd.s32 1, %s27
      %s37 = scalar_select %p34, %s36, %s27
      %p38 = scmp.ge.s32.totalorder %s37, 1
      %s39 = scalar_select %p38, 0, %s37
      %s40 = ssub.s32 %s28, %s35
      %s41 = ssub.s32 %s27, %s39
      %s42 = sor.u32 %s40, %s41
      %p43 = scmp.eq.s32.totalorder %s42, 0
      %s45 = sadd.s32 %s44, 1
      %s46 = scalar_select %p43, %s44, %s45
      %p49 = pneg %p43
      %p50 = scmp.eq.s32.totalorder %s20, 2
      %p51 = por %p49, %p50
      %p52 = scmp.ne.s32.totalorder %s44, %s47
      %p53 = scmp.eq.s32.totalorder %s20, 0
      %p54 = por %p52, %p53
      %p55 = scmp.ne.s32.totalorder %s44, %s47
      %p56 = scmp.eq.s32.totalorder %s25, 2
      %p57 = por %p55, %p56
      %p58 = scmp.ne.s32.totalorder %s47, %s48
      %p59 = scmp.eq.s32.totalorder %s25, 0
      %p60 = por %p58, %p59
      %p61 = scmp.ne.s32.totalorder %s47, %s48
      %p62 = scmp.eq.s32.totalorder %s26, 2
      %p63 = por %p61, %p62
      %p65 = scmp.ne.s32.totalorder %s48, %s64
      %p66 = scmp.eq.s32.totalorder %s26, 0
      %p67 = por %p65, %p66
      %s69 = sadd.s32 %s68, 1
      %p72 = scmp.eq.s32.totalorder %s20, 2
      %p73 = scmp.ne.s32.totalorder %s68, %s70
      %p74 = scmp.eq.s32.totalorder %s20, 0
      %p75 = por %p73, %p74
      %p76 = scmp.ne.s32.totalorder %s68, %s70
      %p77 = scmp.eq.s32.totalorder %s25, 2
      %p78 = por %p76, %p77
      %p79 = scmp.ne.s32.totalorder %s70, %s71
      %p80 = scmp.eq.s32.totalorder %s25, 0
      %p81 = por %p79, %p80
      %p82 = scmp.ne.s32.totalorder %s70, %s71
      %p83 = scmp.eq.s32.totalorder %s26, 2
      %p84 = por %p82, %p83
      %p86 = scmp.ne.s32.totalorder %s71, %s85
      %p87 = scmp.eq.s32.totalorder %s26, 0
      %p88 = por %p86, %p87
      %s89 = ssub.s32 %s27, %s39
      %p90 = scmp.eq.s32.totalorder %s89, 0
      %s92 = sadd.s32 %s91, 1
      %s93 = scalar_select %p90, %s91, %s92
      %p96 = pneg %p90
      %p97 = scmp.eq.s32.totalorder %s20, 2
      %p98 = por %p96, %p97
      %p99 = scmp.ne.s32.totalorder %s91, %s94
      %p100 = scmp.eq.s32.totalorder %s20, 0
      %p101 = por %p99, %p100
      %p102 = scmp.ne.s32.totalorder %s91, %s94
      %p103 = scmp.eq.s32.totalorder %s25, 2
      %p104 = por %p102, %p103
      %p105 = scmp.ne.s32.totalorder %s94, %s95
      %p106 = scmp.eq.s32.totalorder %s25, 0
      %p107 = por %p105, %p106
      %p108 = scmp.ne.s32.totalorder %s94, %s95
      %p109 = scmp.eq.s32.totalorder %s26, 2
      %p110 = por %p108, %p109
      %p112 = scmp.ne.s32.totalorder %s95, %s111
      %p113 = scmp.eq.s32.totalorder %s26, 0
      %p114 = por %p112, %p113
      %s115 = ssub.s32 %s28, %s35
      %p116 = scmp.eq.s32.totalorder %s115, 0
      %s118 = sadd.s32 %s117, 1
      %s119 = scalar_select %p116, %s117, %s118
      %p122 = pneg %p116
      %p123 = scmp.eq.s32.totalorder %s20, 2
      %p124 = por %p122, %p123
      %p125 = scmp.ne.s32.totalorder %s117, %s120
      %p126 = scmp.eq.s32.totalorder %s20, 0
      %p127 = por %p125, %p126
      %p128 = scmp.ne.s32.totalorder %s117, %s120
      %p129 = scmp.eq.s32.totalorder %s25, 2
      %p130 = por %p128, %p129
      %p131 = scmp.ne.s32.totalorder %s120, %s121
      %p132 = scmp.eq.s32.totalorder %s25, 0
      %p133 = por %p131, %p132
      %p134 = scmp.ne.s32.totalorder %s120, %s121
      %p135 = scmp.eq.s32.totalorder %s26, 2
      %p136 = por %p134, %p135
      %p138 = scmp.ne.s32.totalorder %s121, %s137
      %p139 = scmp.eq.s32.totalorder %s26, 0
      %p140 = por %p138, %p139
      %s142 = sadd.s32 %s141, 1
      %p145 = scmp.eq.s32.totalorder %s20, 2
      %p146 = scmp.ne.s32.totalorder %s141, %s143
      %p147 = scmp.eq.s32.totalorder %s20, 0
      %p148 = por %p146, %p147
      %p149 = scmp.ne.s32.totalorder %s141, %s143
      %p150 = scmp.eq.s32.totalorder %s25, 2
      %p151 = por %p149, %p150
      %p152 = scmp.ne.s32.totalorder %s143, %s144
      %p153 = scmp.eq.s32.totalorder %s25, 0
      %p154 = por %p152, %p153
      %p155 = scmp.ne.s32.totalorder %s143, %s144
      %p156 = scmp.eq.s32.totalorder %s26, 2
      %p157 = por %p155, %p156
      %p159 = scmp.ne.s32.totalorder %s144, %s158
      %p160 = scmp.eq.s32.totalorder %s26, 0
      %p161 = por %p159, %p160
      %s163 = sadd.s32 %s162, 1
      %p166 = scmp.eq.s32.totalorder %s20, 2
      %p167 = scmp.ne.s32.totalorder %s162, %s164
      %p168 = scmp.eq.s32.totalorder %s20, 0
      %p169 = por %p167, %p168
      %p170 = scmp.ne.s32.totalorder %s162, %s164
      %p171 = scmp.eq.s32.totalorder %s25, 2
      %p172 = por %p170, %p171
      %p173 = scmp.ne.s32.totalorder %s164, %s165
      %p174 = scmp.eq.s32.totalorder %s25, 0
      %p175 = por %p173, %p174
      %p176 = scmp.ne.s32.totalorder %s164, %s165
      %p177 = scmp.eq.s32.totalorder %s26, 2
      %p178 = por %p176, %p177
      %p180 = scmp.ne.s32.totalorder %s165, %s179
      %p181 = scmp.eq.s32.totalorder %s26, 0
      %p182 = por %p180, %p181
      %s183 = ssub.s32 %s27, %s39
      %p184 = scmp.eq.s32.totalorder %s183, 0
      %s186 = sadd.s32 %s185, 1
      %s187 = scalar_select %p184, %s185, %s186
      %p190 = pneg %p184
      %p191 = scmp.eq.s32.totalorder %s20, 2
      %p192 = por %p190, %p191
      %p193 = scmp.ne.s32.totalorder %s185, %s188
      %p194 = scmp.eq.s32.totalorder %s20, 0
      %p195 = por %p193, %p194
      %p196 = scmp.ne.s32.totalorder %s185, %s188
      %p197 = scmp.eq.s32.totalorder %s25, 2
      %p198 = por %p196, %p197
      %p199 = scmp.ne.s32.totalorder %s188, %s189
      %p200 = scmp.eq.s32.totalorder %s25, 0
      %p201 = por %p199, %p200
      %p202 = scmp.ne.s32.totalorder %s188, %s189
      %p203 = scmp.eq.s32.totalorder %s26, 2
      %p204 = por %p202, %p203
      %p206 = scmp.ne.s32.totalorder %s189, %s205
      %p207 = scmp.eq.s32.totalorder %s26, 0
      %p208 = por %p206, %p207
      %s209 = ssub.s32 %s27, %s39
      %p210 = scmp.eq.s32.totalorder %s209, 0
      %s212 = sadd.s32 %s211, 1
      %s213 = scalar_select %p210, %s211, %s212
      %p216 = pneg %p210
      %p217 = scmp.eq.s32.totalorder %s20, 2
      %p218 = por %p216, %p217
      %p219 = scmp.ne.s32.totalorder %s211, %s214
      %p220 = scmp.eq.s32.totalorder %s20, 0
      %p221 = por %p219, %p220
      %p222 = scmp.ne.s32.totalorder %s211, %s214
      %p223 = scmp.eq.s32.totalorder %s25, 2
      %p224 = por %p222, %p223
      %p225 = scmp.ne.s32.totalorder %s214, %s215
      %p226 = scmp.eq.s32.totalorder %s25, 0
      %p227 = por %p225, %p226
      %p228 = scmp.ne.s32.totalorder %s214, %s215
      %p229 = scmp.eq.s32.totalorder %s26, 2
      %p230 = por %p228, %p229
      %p232 = scmp.ne.s32.totalorder %s215, %s231
      %p233 = scmp.eq.s32.totalorder %s26, 0
      %p234 = por %p232, %p233
      %p235 = scmp.le.s32.totalorder 1, %s20
      %p236 = scmp.lt.s32.totalorder %s20, 4
      %p237 = pnand %p235, %p236
      %p238 = pneg %p237
      // Predicated region
      $region9: #{tpu_custom_call.1} parent=5 // pred_check
        _
      $region10: #{tpu_custom_call.1} parent=5 // pred_check_branch
        %240 = sbr.rel (%p237) target = $region12
      $region11: #{tpu_custom_call.1} parent=5 // pred_region
        %s241 = ssub.s32 %s20, 1
        // Predicated region
        $region13: #{tpu_custom_call.1} parent=11 // pred_check
          %p242 = pneg %p81
        $region14: #{tpu_custom_call.1} parent=11 // pred_check_branch
          %244 = sbr.rel (%p242) target = $region16
        $region15: #{tpu_custom_call.1} parent=11 // pred_region
          _
        $region16: #{tpu_custom_call.1} parent=11 // pred_fallthru
          _
        // Predicated region
        $region17: #{tpu_custom_call.1} parent=11 // pred_check
          %p245 = pneg %p107
        $region18: #{tpu_custom_call.1} parent=11 // pred_check_branch
          %247 = sbr.rel (%p245) target = $region20
        $region19: #{tpu_custom_call.1} parent=11 // pred_region
          %p248 = scmp.lt.s32.totalorder %s29, 0
          %s249 = scalar_select %p248, %s29, 0
          %s250 = smul.addr %s249, 8
          %s251 = scalar_lea.vmem %s2, %s250
        $region20: #{tpu_custom_call.1} parent=11 // pred_fallthru
          _
        // Predicated region
        $region21: #{tpu_custom_call.1} parent=11 // pred_check
          %p252 = pneg %p154
        $region22: #{tpu_custom_call.1} parent=11 // pred_check_branch
          %254 = sbr.rel (%p252) target = $region24
        $region23: #{tpu_custom_call.1} parent=11 // pred_region
          %s256 = ssub.s32 2048, 2048
          %257 = vsyncadd [#allocation6], %s256
          %s258 = sshll.u32 [#allocation7], 4
          %s259 = int_to_ptr.vmem [resolvable:$true] %s258
          %264 = dma.hbm_to_vmem [thread:$0]  %s4, 2048, %s259, [#allocation6], 128, 128, 8
        $region24: #{tpu_custom_call.1} parent=11 // pred_fallthru
          _
        // Predicated region
        $region25: #{tpu_custom_call.1} parent=11 // pred_check
          %p265 = pneg %p175
        $region26: #{tpu_custom_call.1} parent=11 // pred_check_branch
          %267 = sbr.rel (%p265) target = $region28
        $region27: #{tpu_custom_call.1} parent=11 // pred_region
          _
        $region28: #{tpu_custom_call.1} parent=11 // pred_fallthru
          _
        // Predicated region
        $region29: #{tpu_custom_call.1} parent=11 // pred_check
          %p268 = pneg %p201
        $region30: #{tpu_custom_call.1} parent=11 // pred_check_branch
          %270 = sbr.rel (%p268) target = $region32
        $region31: #{tpu_custom_call.1} parent=11 // pred_region
          %p271 = scmp.lt.s32.totalorder %s29, 0
          %s272 = scalar_select %p271, %s29, 0
          %s273 = smul.addr %s272, 8
          %s274 = scalar_lea.vmem %s6, %s273
        $region32: #{tpu_custom_call.1} parent=11 // pred_fallthru
          _
      $region12: #{tpu_custom_call.1} parent=5 // pred_fallthru
        _
      %p275 = scmp.lt.s32.totalorder %s20, 3
      // Predicated region
      $region33: #{tpu_custom_call.1} parent=5 // pred_check
        %p276 = pneg %p275
      $region34: #{tpu_custom_call.1} parent=5 // pred_check_branch
        %278 = sbr.rel (%p276) target = $region36
      $region35: #{tpu_custom_call.1} parent=5 // pred_region
        // Predicated region
        $region37: #{tpu_custom_call.1} parent=35 // pred_check
          %p279 = pneg %p54
        $region38: #{tpu_custom_call.1} parent=35 // pred_check_branch
          %281 = sbr.rel (%p279) target = $region40
        $region39: #{tpu_custom_call.1} parent=35 // pred_region
          %s282 = sand.u32 %s44, 1
          %s283 = scalar_lea.sflag [#allocation3], %s282
          %s284 = sand.u32 %s44, 1
          %s285 = smul.addr %s284, 8
          %s286 = scalar_lea.vmem [#allocation2], %s285
          %s288 = ssub.s32 128, 128
          %289 = vsyncadd %s283, %s288
          %s290 = sadd.s32 %s27, %s28
          %s291 = smul.addr %s290, 128
          %s292 = scalar_lea.hbm %s0, %s291
          %s294 = sshll.u32 %s286, 4
          %s295 = int_to_ptr.vmem [resolvable:$true] %s294
          %297 = dma.hbm_to_vmem [thread:$0]  %s292, 128, %s295, %s283
        $region40: #{tpu_custom_call.1} parent=35 // pred_fallthru
          _
        // Predicated region
        $region41: #{tpu_custom_call.1} parent=35 // pred_check
          %p298 = pneg %p127
        $region42: #{tpu_custom_call.1} parent=35 // pred_check_branch
          %300 = sbr.rel (%p298) target = $region44
        $region43: #{tpu_custom_call.1} parent=35 // pred_region
          %s301 = sand.u32 %s20, 1
          %s302 = scalar_lea.sflag [#allocation6], %s301
          %s303 = sand.u32 %s117, 1
          %s304 = smul.addr %s303, 128
          %s305 = scalar_lea.vmem [#allocation5], %s304
          %s307 = ssub.s32 2048, 2048
          %308 = vsyncadd %s302, %s307
          %s309 = smul.addr %s28, 16
          %s310 = smul.addr %s309, 128
          %s311 = scalar_lea.hbm %s3, %s310
          %s312 = sshll.u32 %s305, 4
          %s313 = int_to_ptr.vmem [resolvable:$true] %s312
          %318 = dma.hbm_to_vmem [thread:$0]  %s311, 2048, %s313, %s302, 128, 128, 8
        $region44: #{tpu_custom_call.1} parent=35 // pred_fallthru
          _
      $region36: #{tpu_custom_call.1} parent=5 // pred_fallthru
        _
      %p319 = scmp.le.s32.totalorder 1, %s20
      %p320 = scmp.lt.s32.totalorder %s20, 4
      %p321 = pnand %p319, %p320
      %p322 = pneg %p321
      // Predicated region
      $region45: #{tpu_custom_call.1} parent=5 // pred_check
        _
      $region46: #{tpu_custom_call.1} parent=5 // pred_check_branch
        %324 = sbr.rel (%p321) target = $region48
      $region47: #{tpu_custom_call.1} parent=5 // pred_region
        %s325 = ssub.s32 %s20, 1
        %s326 = sand.u32 %s47, 1
        %s327 = scalar_lea.sflag [#allocation3], %s326
        %s328 = sand.u32 %s47, 1
        %s329 = smul.addr %s328, 8
        %s330 = scalar_lea.vmem [#allocation2], %s329
        // Predicated region
        $region49: #{tpu_custom_call.1} parent=47 // pred_check
          %p331 = pneg %p60
        $region50: #{tpu_custom_call.1} parent=47 // pred_check_branch
          %333 = sbr.rel (%p331) target = $region52
        $region51: #{tpu_custom_call.1} parent=47 // pred_region
          %334 = dma.done %s327, 128
        $region52: #{tpu_custom_call.1} parent=47 // pred_fallthru
          _
        %s335 = sand.u32 %s25, 1
        %s336 = scalar_lea.sflag [#allocation6], %s335
        %s337 = sand.u32 %s120, 1
        %s338 = smul.addr %s337, 128
        %s339 = scalar_lea.vmem [#allocation5], %s338
        // Predicated region
        $region53: #{tpu_custom_call.1} parent=47 // pred_check
          %p340 = pneg %p133
        $region54: #{tpu_custom_call.1} parent=47 // pred_check_branch
          %342 = sbr.rel (%p340) target = $region56
        $region55: #{tpu_custom_call.1} parent=47 // pred_region
          %343 = dma.done %s336, 2048
        $region56: #{tpu_custom_call.1} parent=47 // pred_fallthru
          _
        // Predicated region
        $region57: #{tpu_custom_call.1} parent=47 // pred_check
          %p344 = pneg %p154
        $region58: #{tpu_custom_call.1} parent=47 // pred_check_branch
          %346 = sbr.rel (%p344) target = $region60
        $region59: #{tpu_custom_call.1} parent=47 // pred_region
          %347 = dma.done [#allocation6], 2048
        $region60: #{tpu_custom_call.1} parent=47 // pred_fallthru
          _
        %s348 = sand.u32 %s47, 1
        %s349 = scalar_lea.sflag [#allocation3], %s348
        %s350 = sand.u32 %s47, 1
        %s351 = smul.addr %s350, 8
        %s352 = scalar_lea.vmem [#allocation2], %s351
        %p353 = pneg %p60
        %p354 = pneg %p57
        %p355 = pneg %p81
        %p356 = pneg %p78
        %p357 = scmp.lt.s32.totalorder %s29, 0
        %s358 = scalar_select %p357, %s29, 0
        %s359 = smul.addr %s358, 8
        %s360 = scalar_lea.vmem %s2, %s359
        %p361 = pneg %p107
        %p362 = pneg %p104
        %s363 = sand.u32 %s25, 1
        %s364 = scalar_lea.sflag [#allocation6], %s363
        %s365 = sand.u32 %s120, 1
        %s366 = smul.addr %s365, 128
        %s367 = scalar_lea.vmem [#allocation5], %s366
        %p368 = pneg %p133
        %p369 = pneg %p130
        %p370 = pneg %p154
        %p371 = pneg %p151
        %p372 = pneg %p175
        %p373 = pneg %p172
        %p374 = scmp.lt.s32.totalorder %s29, 0
        %s375 = scalar_select %p374, %s29, 0
        %s376 = smul.addr %s375, 8
        %s377 = scalar_lea.vmem %s6, %s376
        %p378 = pneg %p201
        %p379 = pneg %p198
        %p380 = pneg %p227
        %p381 = pneg %p224
        %p382 = scmp.lt.s32.totalorder %s29, 0
        %s383 = scalar_select %p382, %s29, 0
        %s384 = smul.addr %s383, 8
        %s385 = scalar_lea.vmem %s2, %s384
        %p386 = scmp.lt.s32.totalorder %s29, 0
        %s387 = scalar_select %p386, %s29, 0
        %s388 = smul.addr %s387, 8
        %s389 = scalar_lea.vmem %s6, %s388
        %p390 = scmp.eq.s32.totalorder %s30, 0
        // Predicated region
        $region61: #{tpu_custom_call.1} parent=47 // pred_check
          %p391 = pneg %p390
        $region62: #{tpu_custom_call.1} parent=47 // pred_check_branch
          %393 = sbr.rel (%p391) target = $region64
        $region63: #{tpu_custom_call.1} parent=47 // pred_region
          %v394 = vld [vmem:[%s385] sm:$0xff]
          %v395 = vld [vmem:[#allocation7] sm:$0xff]
          %v396 = vld [vmem:[#allocation7 + $0x8] sm:$0xff]
          %v397 = vld [vmem:[#allocation7 + $0x10] sm:$0xff]
          %v398 = vld [vmem:[#allocation7 + $0x18] sm:$0xff]
          %v399 = vld [vmem:[#allocation7 + $0x20] sm:$0xff]
          %v400 = vld [vmem:[#allocation7 + $0x28] sm:$0xff]
          %v401 = vld [vmem:[#allocation7 + $0x30] sm:$0xff]
          %v402 = vld [vmem:[#allocation7 + $0x38] sm:$0xff]
          %v403 = vld [vmem:[#allocation7 + $0x40] sm:$0xff]
          %v404 = vld [vmem:[#allocation7 + $0x48] sm:$0xff]
          %v405 = vld [vmem:[#allocation7 + $0x50] sm:$0xff]
          %v406 = vld [vmem:[#allocation7 + $0x58] sm:$0xff]
          %v407 = vld [vmem:[#allocation7 + $0x60] sm:$0xff]
          %v408 = vld [vmem:[#allocation7 + $0x68] sm:$0xff]
          %v409 = vld [vmem:[#allocation7 + $0x70] sm:$0xff]
          %v410 = vld [vmem:[#allocation7 + $0x78] sm:$0xff]
          %v411 = vld [vmem:[%s389] sm:$0xff]
          %v412 = vld [vmem:[%s5] sm:$0x1]
          %414 = vset.pattern.permute.xlu0 0
          %415 = vperm.xlu0 %414, %v411
          %v416 = vpop.permute.xlu0 %415
          %v419 = vlaneseq
          %v420 = vshrl.u32 %v419, 7
          %v421 = vsub.s32 0, %v420
          %v422 = vrot.slane %v412, %v421
          %v424 = vmul.f32 %v416, %v422
          %425 = vmatprep.subr.mxu0 0.0
          %426 = vmatpush1.msra.mxu0 %v395
          %427 = vmatprep.subr.mxu0 0.0
          %428 = vmatpush1.msra.mxu0 %v396
          %429 = vmatprep.subr.mxu0 0.0
          %430 = vmatpush1.msra.mxu0 %v397
          %431 = vmatprep.subr.mxu0 0.0
          %432 = vmatpush1.msra.mxu0 %v398
          %433 = vmatprep.subr.mxu0 0.0
          %434 = vmatpush1.msra.mxu0 %v399
          %435 = vmatprep.subr.mxu0 0.0
          %436 = vmatpush1.msra.mxu0 %v400
          %437 = vmatprep.subr.mxu0 0.0
          %438 = vmatpush1.msra.mxu0 %v401
          %439 = vmatprep.subr.mxu0 0.0
          %440 = vmatpush1.msra.mxu0 %v402
          %441 = vmatprep.subr.mxu0 0.0
          %442 = vmatpush1.msra.mxu0 %v403
          %443 = vmatprep.subr.mxu0 0.0
          %444 = vmatpush1.msra.mxu0 %v404
          %445 = vmatprep.subr.mxu0 0.0
          %446 = vmatpush1.msra.mxu0 %v405
          %447 = vmatprep.subr.mxu0 0.0
          %448 = vmatpush1.msra.mxu0 %v406
          %449 = vmatprep.subr.mxu0 0.0
          %450 = vmatpush1.msra.mxu0 %v407
          %451 = vmatprep.subr.mxu0 0.0
          %452 = vmatpush1.msra.mxu0 %v408
          %453 = vmatprep.subr.mxu0 0.0
          %454 = vmatpush1.msra.mxu0 %v409
          %455 = vmatprep.subr.mxu0 0.0
          %456 = vmatpush1.msra.mxu0 %v410
          %457 = vmatprep.subr.mxu0 0.0
          %458 = vmatpush1.msra.mxu0 0.0
          %459 = vmatprep.subr.mxu0 0.0
          %460 = vmatpush1.msra.mxu0 0.0
          %461 = vmatprep.subr.mxu0 0.0
          %462 = vmatpush1.msra.mxu0 0.0
          %463 = vmatprep.subr.mxu0 0.0
          %464 = vmatpush1.msra.mxu0 0.0
          %465 = vmatprep.subr.mxu0 0.0
          %466 = vmatpush1.msra.mxu0 0.0
          %467 = vmatprep.subr.mxu0 0.0
          %468 = vmatpush1.msra.mxu0 0.0
          %469 = vmatprep.subr.mxu0 0.0
          %470 = vmatpush1.msra.mxu0 0.0
          %471 = vmatprep.subr.mxu0 0.0
          %472 = vmatpush1.msra.mxu0 0.0
          %473 = vmatprep.subr.mxu0 0.0
          %474 = vmatpush1.msra.mxu0 0.0
          %475 = vmatprep.subr.mxu0 0.0
          %476 = vmatpush1.msra.mxu0 0.0
          %477 = vmatprep.subr.mxu0 0.0
          %478 = vmatpush1.msra.mxu0 0.0
          %479 = vmatprep.subr.mxu0 0.0
          %480 = vmatpush1.msra.mxu0 0.0
          %481 = vmatprep.subr.mxu0 0.0
          %482 = vmatpush1.msra.mxu0 0.0
          %483 = vmatprep.subr.mxu0 0.0
          %484 = vmatpush1.msra.mxu0 0.0
          %485 = vmatprep.subr.mxu0 0.0
          %486 = vmatpush1.msra.mxu0 0.0
          %487 = vmatprep.subr.mxu0 0.0
          %488 = vmatpush1.msra.mxu0 0.0
          %489 = vmatprep.mubr.f32.mxu0 0.0
          %490 = vmatmul.mubr.f32.gmra.mrb[0].mxu0 %v394
          %v491 = vpop.f32.mrb[0].mxu0
          %v492 = vadd.f32 %v424, %v491
          %v493 = vpop.f32.mrb[0].mxu0
          %494 = vdwg.mxu0
          %495 = vst [vmem:[#allocation8] sm:$0xff] %v492
        $region64: #{tpu_custom_call.1} parent=47 // pred_fallthru
          _
        %v496 = vld [vmem:[%s330] sm:$0xff]
        %v497 = vld [vmem:[%s1] sm:$0xff]
        %vm498 = vcmask 64512
        %v500 = vsel %vm498, %v496, 0
        %502 = vmatprep.subr.mxu0 0.0
        %503 = vmatpush1.msra.mxu0 %v497
        %504 = vmatprep.subr.mxu0 0.0
        %505 = vmatpush1.msra.mxu0 0.0
        %506 = vmatprep.subr.mxu0 0.0
        %507 = vmatpush1.msra.mxu0 0.0
        %508 = vmatprep.subr.mxu0 0.0
        %509 = vmatpush1.msra.mxu0 0.0
        %510 = vmatprep.subr.mxu0 0.0
        %511 = vmatpush1.msra.mxu0 0.0
        %512 = vmatprep.subr.mxu0 0.0
        %513 = vmatpush1.msra.mxu0 0.0
        %514 = vmatprep.subr.mxu0 0.0
        %515 = vmatpush1.msra.mxu0 0.0
        %516 = vmatprep.subr.mxu0 0.0
        %517 = vmatpush1.msra.mxu0 0.0
        %518 = vmatprep.subr.mxu0 0.0
        %519 = vmatpush1.msra.mxu0 0.0
        %520 = vmatprep.subr.mxu0 0.0
        %521 = vmatpush1.msra.mxu0 0.0
        %522 = vmatprep.subr.mxu0 0.0
        %523 = vmatpush1.msra.mxu0 0.0
        %524 = vmatprep.subr.mxu0 0.0
        %525 = vmatpush1.msra.mxu0 0.0
        %526 = vmatprep.subr.mxu0 0.0
        %527 = vmatpush1.msra.mxu0 0.0
        %528 = vmatprep.subr.mxu0 0.0
        %529 = vmatpush1.msra.mxu0 0.0
        %530 = vmatprep.subr.mxu0 0.0
        %531 = vmatpush1.msra.mxu0 0.0
        %532 = vmatprep.subr.mxu0 0.0
        %533 = vmatpush1.msra.mxu0 0.0
        %534 = vmatprep.subr.mxu0 0.0
        %535 = vmatpush1.msra.mxu0 0.0
        %536 = vmatprep.subr.mxu0 0.0
        %537 = vmatpush1.msra.mxu0 0.0
        %538 = vmatprep.subr.mxu0 0.0
        %539 = vmatpush1.msra.mxu0 0.0
        %540 = vmatprep.subr.mxu0 0.0
        %541 = vmatpush1.msra.mxu0 0.0
        %542 = vmatprep.subr.mxu0 0.0
        %543 = vmatpush1.msra.mxu0 0.0
        %544 = vmatprep.subr.mxu0 0.0
        %545 = vmatpush1.msra.mxu0 0.0
        %546 = vmatprep.subr.mxu0 0.0
        %547 = vmatpush1.msra.mxu0 0.0
        %548 = vmatprep.subr.mxu0 0.0
        %549 = vmatpush1.msra.mxu0 0.0
        %550 = vmatprep.subr.mxu0 0.0
        %551 = vmatpush1.msra.mxu0 0.0
        %552 = vmatprep.subr.mxu0 0.0
        %553 = vmatpush1.msra.mxu0 0.0
        %554 = vmatprep.subr.mxu0 0.0
        %555 = vmatpush1.msra.mxu0 0.0
        %556 = vmatprep.subr.mxu0 0.0
        %557 = vmatpush1.msra.mxu0 0.0
        %558 = vmatprep.subr.mxu0 0.0
        %559 = vmatpush1.msra.mxu0 0.0
        %560 = vmatprep.subr.mxu0 0.0
        %561 = vmatpush1.msra.mxu0 0.0
        %562 = vmatprep.subr.mxu0 0.0
        %563 = vmatpush1.msra.mxu0 0.0
        %564 = vmatprep.subr.mxu0 0.0
        %565 = vmatpush1.msra.mxu0 0.0
        %566 = vmatprep.mubr.f32.mxu0 0.0
        %567 = vmatmul.mubr.f32.gmra.mrb[0].mxu0 %v500
        %v568 = vpop.f32.mrb[0].mxu0
        %v569 = vadd.f32 0.0, %v568
        %v570 = vpop.f32.mrb[0].mxu0
        %571 = vdwg.mxu0
        %v572 = vld [vmem:[#allocation8] sm:$0xff]
        %v573 = vld [vmem:[%s339] sm:$0xff]
        %v574 = vld [vmem:[%s339 + $0x8] sm:$0xff]
        %v575 = vld [vmem:[%s339 + $0x10] sm:$0xff]
        %v576 = vld [vmem:[%s339 + $0x18] sm:$0xff]
        %v577 = vld [vmem:[%s339 + $0x20] sm:$0xff]
        %v578 = vld [vmem:[%s339 + $0x28] sm:$0xff]
        %v579 = vld [vmem:[%s339 + $0x30] sm:$0xff]
        %v580 = vld [vmem:[%s339 + $0x38] sm:$0xff]
        %v581 = vld [vmem:[%s339 + $0x40] sm:$0xff]
        %v582 = vld [vmem:[%s339 + $0x48] sm:$0xff]
        %v583 = vld [vmem:[%s339 + $0x50] sm:$0xff]
        %v584 = vld [vmem:[%s339 + $0x58] sm:$0xff]
        %v585 = vld [vmem:[%s339 + $0x60] sm:$0xff]
        %v586 = vld [vmem:[%s339 + $0x68] sm:$0xff]
        %v587 = vld [vmem:[%s339 + $0x70] sm:$0xff]
        %v588 = vld [vmem:[%s339 + $0x78] sm:$0xff]
        %589 = vmatprep.subr.mxu0 0.0
        %590 = vmatpush1.msra.mxu0 %v573
        %591 = vmatprep.subr.mxu0 0.0
        %592 = vmatpush1.msra.mxu0 %v574
        %593 = vmatprep.subr.mxu0 0.0
        %594 = vmatpush1.msra.mxu0 %v575
        %595 = vmatprep.subr.mxu0 0.0
        %596 = vmatpush1.msra.mxu0 %v576
        %597 = vmatprep.subr.mxu0 0.0
        %598 = vmatpush1.msra.mxu0 %v577
        %599 = vmatprep.subr.mxu0 0.0
        %600 = vmatpush1.msra.mxu0 %v578
        %601 = vmatprep.subr.mxu0 0.0
        %602 = vmatpush1.msra.mxu0 %v579
        %603 = vmatprep.subr.mxu0 0.0
        %604 = vmatpush1.msra.mxu0 %v580
        %605 = vmatprep.subr.mxu0 0.0
        %606 = vmatpush1.msra.mxu0 %v581
        %607 = vmatprep.subr.mxu0 0.0
        %608 = vmatpush1.msra.mxu0 %v582
        %609 = vmatprep.subr.mxu0 0.0
        %610 = vmatpush1.msra.mxu0 %v583
        %611 = vmatprep.subr.mxu0 0.0
        %612 = vmatpush1.msra.mxu0 %v584
        %613 = vmatprep.subr.mxu0 0.0
        %614 = vmatpush1.msra.mxu0 %v585
        %615 = vmatprep.subr.mxu0 0.0
        %616 = vmatpush1.msra.mxu0 %v586
        %617 = vmatprep.subr.mxu0 0.0
        %618 = vmatpush1.msra.mxu0 %v587
        %619 = vmatprep.subr.mxu0 0.0
        %620 = vmatpush1.msra.mxu0 %v588
        %621 = vmatprep.subr.mxu0 0.0
        %622 = vmatpush1.msra.mxu0 0.0
        %623 = vmatprep.subr.mxu0 0.0
        %624 = vmatpush1.msra.mxu0 0.0
        %625 = vmatprep.subr.mxu0 0.0
        %626 = vmatpush1.msra.mxu0 0.0
        %627 = vmatprep.subr.mxu0 0.0
        %628 = vmatpush1.msra.mxu0 0.0
        %629 = vmatprep.subr.mxu0 0.0
        %630 = vmatpush1.msra.mxu0 0.0
        %631 = vmatprep.subr.mxu0 0.0
        %632 = vmatpush1.msra.mxu0 0.0
        %633 = vmatprep.subr.mxu0 0.0
        %634 = vmatpush1.msra.mxu0 0.0
        %635 = vmatprep.subr.mxu0 0.0
        %636 = vmatpush1.msra.mxu0 0.0
        %637 = vmatprep.subr.mxu0 0.0
        %638 = vmatpush1.msra.mxu0 0.0
        %639 = vmatprep.subr.mxu0 0.0
        %640 = vmatpush1.msra.mxu0 0.0
        %641 = vmatprep.subr.mxu0 0.0
        %642 = vmatpush1.msra.mxu0 0.0
        %643 = vmatprep.subr.mxu0 0.0
        %644 = vmatpush1.msra.mxu0 0.0
        %645 = vmatprep.subr.mxu0 0.0
        %646 = vmatpush1.msra.mxu0 0.0
        %647 = vmatprep.subr.mxu0 0.0
        %648 = vmatpush1.msra.mxu0 0.0
        %649 = vmatprep.subr.mxu0 0.0
        %650 = vmatpush1.msra.mxu0 0.0
        %651 = vmatprep.subr.mxu0 0.0
        %652 = vmatpush1.msra.mxu0 0.0
        %653 = vmatprep.mubr.f32.mxu0 0.0
        %654 = vmatmul.mubr.f32.gmra.mrb[0].mxu0 %v569
        %v655 = vpop.f32.mrb[0].mxu0
        %v656 = vadd.f32 0.0, %v655
        %v657 = vpop.f32.mrb[0].mxu0
        %658 = vdwg.mxu0
        %v659 = vadd.f32 %v572, %v656
        %660 = vst [vmem:[#allocation8] sm:$0xff] %v659
        %p661 = scmp.eq.s32.totalorder %s30, 2
        // Predicated region
        $region65: #{tpu_custom_call.1} parent=47 // pred_check
          %p662 = pneg %p661
        $region66: #{tpu_custom_call.1} parent=47 // pred_check_branch
          %664 = sbr.rel (%p662) target = $region68
        $region67: #{tpu_custom_call.1} parent=47 // pred_region
          %v665 = vld [vmem:[#allocation8] sm:$0xff]
          %v666 = vtanh.pop %v665
          %667 = vst [vmem:[#allocation8] sm:$0xff] %v666
        $region68: #{tpu_custom_call.1} parent=47 // pred_fallthru
          _
        // Predicated region
        $region69: #{tpu_custom_call.1} parent=47 // pred_check
          %p668 = pneg %p224
        $region70: #{tpu_custom_call.1} parent=47 // pred_check_branch
          %670 = sbr.rel (%p668) target = $region72
        $region71: #{tpu_custom_call.1} parent=47 // pred_region
          %s672 = ssub.s32 128, 128
          %673 = vsyncadd [#allocation4], %s672
          %s674 = smul.addr %s29, 128
          %s675 = scalar_lea.hbm %s7, %s674
          %s677 = sshll.u32 [#allocation8], 4
          %s678 = int_to_ptr.vmem [resolvable:$true] %s677
          %680 = dma.vmem_to_hbm [thread:$0]  %s678, 128, %s675, [#allocation4]
        $region72: #{tpu_custom_call.1} parent=47 // pred_fallthru
          _
        // Predicated region
        $region73: #{tpu_custom_call.1} parent=47 // pred_check
          %p681 = pneg %p224
        $region74: #{tpu_custom_call.1} parent=47 // pred_check_branch
          %683 = sbr.rel (%p681) target = $region76
        $region75: #{tpu_custom_call.1} parent=47 // pred_region
          %684 = dma.done [#allocation4], 128
        $region76: #{tpu_custom_call.1} parent=47 // pred_fallthru
          _
      $region48: #{tpu_custom_call.1} parent=5 // pred_fallthru
        _
      %p685 = scmp.le.s32.totalorder 2, %s20
      // Predicated region
      $region77: #{tpu_custom_call.1} parent=5 // pred_check
        %p686 = pneg %p685
      $region78: #{tpu_custom_call.1} parent=5 // pred_check_branch
        %688 = sbr.rel (%p686) target = $region80
      $region79: #{tpu_custom_call.1} parent=5 // pred_region
        %s689 = ssub.s32 %s20, 2
      $region80: #{tpu_custom_call.1} parent=5 // pred_fallthru
        _
    $region6: #{tpu_custom_call.1} parent=1 // loop_footer
      %s24 = sadd.s32 1, %s20
    $region7: #{tpu_custom_call.1} parent=1 // loop_footer_branch
      %19 = sbr.rel target = $region3
    $region8: #{tpu_custom_call.1} parent=1 // loop_exit
      _
    %690 = vsyncpa [#allocation3], 1
    %s691 = scalar_lea.sflag [#allocation3], 1
    %692 = vsyncpa %s691, 1
    %693 = vsyncpa [#allocation6], 1
    %s694 = scalar_lea.sflag [#allocation6], 1
    %695 = vsyncpa %s694, 1
    %696 = vsyncpa [#allocation4], 1
    %s697 = scalar_lea.sflag [#allocation4], 1
    %698 = vsyncpa %s697, 1

</llo_original>
